<compile_context>
chip_gen: v7x
topology: tpu7x:2x2x1
jax: 0.10.0
libtpu: 0.0.40
codegen_flags: <defaults>
</compile_context>

<pallas_src>
import functools

import jax
import jax.numpy as jnp
from jax.experimental import pallas as pl
from jax.experimental.pallas import tpu as pltpu

_LANE = 128           # padded feature width; lane _LANE-1 is the reserved constant-1 bias lane
_SUBLANE = 8          # f32 sublane count
_MAX_BATCH_TILE = 1024  # multiple of 256; ~6 MiB VMEM/step incl. double-buffering


def _round_up(n: int, m: int) -> int:
    return ((n + m - 1) // m) * m


# ----------------------------- Pallas kernel ---------------------------------

def _make_autoencoder_kernel(n_enc: int, n_total: int, d_in: int,
                             dim_z_out: int, dim_x_out: int, activation: str):
    """Fused MLP kernel.

    Refs: x (TB, d_in) f32, w0 (d_in, 128) f32, b0 (1, 128) f32,
          w_rest (n_total-1, 128, 128) bf16  ->  z (TB, dim_z_out) f32, x_hat (TB, dim_x_out) f32
    """
    if activation == "relu":
        act = lambda h: jnp.maximum(h, 0.0)
    elif activation == "tanh":
        act = jnp.tanh
    else:
        raise ValueError(
            f"Activation {activation!r} not found. Options: ['relu', 'tanh'].")

    def kernel(x_ref, w0_ref, b0_ref, w_ref, z_ref, xhat_ref):
        # ---- Layer 0 on the VPU (d_in is tiny: dim_x + 1). ----
        # Outer-product accumulation of d_in broadcast FMAs builds the 128-lane activation
        # directly from the unpadded input; b0 carries the bias AND the value that the
        # activation maps to 1.0 in lane 127 (constant-1 bias lane for the next layers).
        h = x_ref[:, 0:1] * w0_ref[0:1, :]
        for k in range(1, d_in):
            h = h + x_ref[:, k:k + 1] * w0_ref[k:k + 1, :]
        h = act(h + b0_ref[...])                      # (TB, 128) f32

        # ---- Layers 1 .. n_total-1 on the MXU (bf16 inputs, f32 accumulation). ----
        # Bias is folded into weight row 127 (multiplied by the constant-1 lane);
        # W[127,127] = 1 (relu) / 16 (tanh) keeps the constant lane alive through act.
        for i in range(n_total - 1):
            h = act(jnp.dot(h.astype(jnp.bfloat16), w_ref[i],
                            preferred_element_type=jnp.float32))
            if i == n_enc - 2:
                # Encoder output -> exact-shape (TB, dim_z_out) store (no wrapper slicing).
                z_ref[...] = h[:, :dim_z_out]

        # Decoder output -> exact-shape (TB, dim_x_out) store.
        xhat_ref[...] = h[:, :dim_x_out]

    return kernel


# ------------------------------ packing ---------------------------------------

def pack_autoencoder_params(enc_params, dec_params, activation: str = "relu",
                            feat: int = _LANE):
    """Pack layers for the kernel.

    Returns (w0, b0, w_rest):
      w0     (d_in, feat)   f32   layer-0 weight (VPU path)
      b0     (1, feat)      f32   layer-0 bias row; element feat-1 holds act^-1(1)
      w_rest (L-1, feat, feat) bf16  remaining layers, bias folded into row feat-1,
                                     passthrough value in [feat-1, feat-1]
    """
    if activation not in ("relu", "tanh"):
        raise ValueError(
            f"Activation {activation!r} not found. Options: ['relu', 'tanh'].")
    # act(passthrough) == 1.0 exactly in f32: relu(1) = 1; tanh(16) = 1 - 2e-14 -> rounds to 1.0f.
    passthrough = 1.0 if activation == "relu" else 16.0

    layers = list(enc_params) + list(dec_params)

    w0, b0 = layers[0]
    d_in, d_out0 = w0.shape
    assert d_out0 <= feat - 1, "layer width must fit below the bias lane"
    w0p = jnp.zeros((d_in, feat), jnp.float32).at[:, :d_out0].set(w0.astype(jnp.float32))
    b0p = jnp.zeros((1, feat), jnp.float32).at[0, :d_out0].set(
        b0.reshape(-1).astype(jnp.float32))
    b0p = b0p.at[0, feat - 1].set(passthrough)

    slabs = []
    for w, b in layers[1:]:
        di, do = w.shape
        assert di <= feat - 1 and do <= feat - 1, "layer dims must fit below the bias lane"
        wp = jnp.zeros((feat, feat), jnp.float32)
        wp = wp.at[:di, :do].set(w.astype(jnp.float32))
        wp = wp.at[feat - 1, :do].set(b.reshape(-1).astype(jnp.float32))
        wp = wp.at[feat - 1, feat - 1].set(passthrough)
        slabs.append(wp)
    w_rest = jnp.stack(slabs, axis=0).astype(jnp.bfloat16)
    return w0p, b0p, w_rest


# ------------------------------ wrapper ---------------------------------------

def autoencoder_forward(x, packed, *, n_enc, n_dec, dim_z_out, dim_x_out,
                        activation="relu"):
    """Fused Pallas forward. Returns (z, x_hat) exactly like the PyTorch module."""
    w0, b0, w_rest = packed
    batch, d_in = x.shape
    feat = w0.shape[-1]
    n_total = n_enc + n_dec
    assert n_enc >= 2 and n_dec >= 1 and w_rest.shape[0] == n_total - 1

    x = x.astype(jnp.float32)
    # Batch tile: multiple of 256 for MXU fill at large batch, capped for v5e's 16 MiB scoped
    # VMEM; tiny batches use a single sublane-rounded tile (grid of 1, no padding in the demo).
    tb = _MAX_BATCH_TILE if batch >= _MAX_BATCH_TILE else _round_up(batch, _SUBLANE)
    b_pad = _round_up(batch, tb)
    if b_pad != batch:
        x = jnp.pad(x, ((0, b_pad - batch), (0, 0)))
    grid = (b_pad // tb,)

    kernel = _make_autoencoder_kernel(n_enc, n_total, d_in, dim_z_out, dim_x_out, activation)

    flops = 2 * b_pad * (d_in * feat + (n_total - 1) * feat * feat)
    transcendentals = b_pad * feat * n_total if activation == "tanh" else 0
    bytes_accessed = (4 * b_pad * d_in + 4 * (w0.size + b0.size) + 2 * w_rest.size
                      + 4 * b_pad * (dim_z_out + dim_x_out))

    z, x_hat = pl.pallas_call(
        kernel,
        grid=grid,
        in_specs=[
            pl.BlockSpec((tb, d_in), lambda i: (i, 0)),              # batch-tiled input
            pl.BlockSpec((d_in, feat), lambda i: (0, 0)),            # resident layer-0 weight
            pl.BlockSpec((1, feat), lambda i: (0, 0)),               # resident layer-0 bias
            # Constant index_map -> the whole bf16 weight stack is DMA'd once and stays
            # resident in VMEM across all grid steps (256 KiB, double-buffer cost negligible).
            pl.BlockSpec((n_total - 1, feat, feat), lambda i: (0, 0, 0)),
        ],
        out_specs=(
            pl.BlockSpec((tb, dim_z_out), lambda i: (i, 0)),
            pl.BlockSpec((tb, dim_x_out), lambda i: (i, 0)),
        ),
        out_shape=(
            jax.ShapeDtypeStruct((b_pad, dim_z_out), jnp.float32),
            jax.ShapeDtypeStruct((b_pad, dim_x_out), jnp.float32),
        ),
        compiler_params=pltpu.CompilerParams(
            dimension_semantics=("parallel",),        # shards batch tiles across v7x's 2 TCs
            vmem_limit_bytes=32 * 1024 * 1024),
        cost_estimate=pl.CostEstimate(
            flops=flops,
            transcendentals=transcendentals,
            bytes_accessed=bytes_accessed),
    )(x, w0, b0, w_rest)

    if b_pad != batch:
        z, x_hat = z[:batch], x_hat[:batch]
    return z, x_hat


# ------------------------- parameter construction -----------------------------

def _init_linear(key, in_features, out_features):
    """Deterministic init mimicking torch.nn.Linear default (uniform +- 1/sqrt(in))."""
    kw, kb = jax.random.split(key)
    bound = 1.0 / jnp.sqrt(jnp.float32(in_features))
    # Stored as (in, out) so the math is x @ W  (== x @ weight.T in torch).
    w = jax.random.uniform(kw, (in_features, out_features), jnp.float32, -bound, bound)
    b = jax.random.uniform(kb, (1, out_features), jnp.float32, -bound, bound)
    return w, b


def build_autoencoder_params(key, dim_x, dim_z, num_hidden_layers, size_hidden_layer):
    """Mirror Autoencoder.__init__ layer shapes."""
    enc_dims = [dim_x + 1] + [size_hidden_layer] * (num_hidden_layers + 1) + [dim_z + 1]
    dec_dims = [dim_z + 1] + [size_hidden_layer] * (num_hidden_layers + 1) + [dim_x]

    enc_params, dec_params = [], []
    for i in range(len(enc_dims) - 1):
        key, sub = jax.random.split(key)
        enc_params.append(_init_linear(sub, enc_dims[i], enc_dims[i + 1]))
    for i in range(len(dec_dims) - 1):
        key, sub = jax.random.split(key)
        dec_params.append(_init_linear(sub, dec_dims[i], dec_dims[i + 1]))
    return enc_params, dec_params


# ------------------------------- reference ------------------------------------

def _reference_forward(x, enc_params, dec_params, activation="relu"):
    act = (lambda h: jnp.maximum(h, 0.0)) if activation == "relu" else jnp.tanh
    h = x
    for w, b in enc_params:
        h = act(h @ w + b)
    z = h
    for w, b in dec_params:
        h = act(h @ w + b)
    return z, h


# --------------------------------- main ----------------------------------------

if __name__ == "__main__":
    # Small synthetic configuration consistent with the module:
    #   observer.dim_x = 4, observer.dim_z = 3
    #   options = {numHiddenLayers: 2, sizeHiddenLayer: 32, activation: 'relu'/'tanh'}
    dim_x, dim_z = 4, 3
    num_hidden_layers, size_hidden_layer = 2, 32
    batch = 8

    key = jax.random.PRNGKey(0)
    key, pkey, xkey = jax.random.split(key, 3)

    enc_params, dec_params = build_autoencoder_params(
        pkey, dim_x, dim_z, num_hidden_layers, size_hidden_layer
    )
    n_enc, n_dec = len(enc_params), len(dec_params)

    # Input to the autoencoder is the augmented state of shape (batch, dim_x + 1).
    x = jax.random.normal(xkey, (batch, dim_x + 1), jnp.float32)

    ok = True
    for activation in ("relu", "tanh"):
        packed = pack_autoencoder_params(enc_params, dec_params, activation=activation)

        fwd = jax.jit(functools.partial(
            autoencoder_forward,
            n_enc=n_enc, n_dec=n_dec,
            dim_z_out=dim_z + 1, dim_x_out=dim_x,
            activation=activation))

        z, x_hat = fwd(x, packed)
        jax.block_until_ready((z, x_hat))

        # Correctness check against a pure-JAX f32 reference of the same math.
        # The kernel uses bf16 MXU inputs with f32 accumulation, so tolerance is bf16-scale.
        z_ref, xhat_ref = _reference_forward(x, enc_params, dec_params, activation)
        ok &= (z.shape == (batch, dim_z + 1))
        ok &= (x_hat.shape == (batch, dim_x))
        ok &= bool(jnp.allclose(z, z_ref, atol=3e-2, rtol=3e-2))
        ok &= bool(jnp.allclose(x_hat, xhat_ref, atol=3e-2, rtol=3e-2))

    assert ok, "Pallas autoencoder forward does not match the JAX reference."

    # TODO(synk): Autoencoder.loss (encoder Jacobian + observer ODE residual) is training-only
    # and not part of forward(); it is not implemented here.

    print("KERNEL_OK")
</pallas_src>

<mosaic_0001>
module attributes {stable_mosaic.version = 11 : i64} {
  func.func @kernel(%arg0: i32, %arg1: memref<8x5xf32, #tpu.memory_space<vmem>>, %arg2: memref<5x128xf32, #tpu.memory_space<vmem>>, %arg3: memref<1x128xf32, #tpu.memory_space<vmem>>, %arg4: memref<7x128x128xbf16, #tpu.memory_space<vmem>>, %arg5: memref<8x4xf32, #tpu.memory_space<vmem>>, %arg6: memref<8x4xf32, #tpu.memory_space<vmem>>) attributes {dimension_semantics = [#tpu.dimension_semantics<parallel>], iteration_bounds = array<i64: 1>, scalar_prefetch = 0 : i64, scratch_operands = 0 : i64, tpu.core_type = #tpu.core_type<tc>, window_params = [{transform_indices = @transform_0, window_bounds = array<i64: 8, 5>}, {pipeline_mode = #tpu.pipeline_mode<synchronous>, transform_indices = @transform_1, window_bounds = array<i64: 5, 128>}, {pipeline_mode = #tpu.pipeline_mode<synchronous>, transform_indices = @transform_2, window_bounds = array<i64: 1, 128>}, {pipeline_mode = #tpu.pipeline_mode<synchronous>, transform_indices = @transform_3, window_bounds = array<i64: 7, 128, 128>}, {transform_indices = @transform_4, window_bounds = array<i64: 8, 4>}, {transform_indices = @transform_5, window_bounds = array<i64: 8, 4>}]} {
    %c0 = arith.constant 0 : index
    %c0_0 = arith.constant 0 : index
    %0 = vector.load %arg1[%c0, %c0_0] : memref<8x5xf32, #tpu.memory_space<vmem>>, vector<8x1xf32>
    %c0_1 = arith.constant 0 : index
    %c0_2 = arith.constant 0 : index
    %1 = vector.load %arg2[%c0_1, %c0_2] : memref<5x128xf32, #tpu.memory_space<vmem>>, vector<1x128xf32>
    %2 = vector.broadcast %0 : vector<8x1xf32> to vector<8x128xf32>
    %3 = vector.broadcast %1 : vector<1x128xf32> to vector<8x128xf32>
    %4 = arith.mulf %2, %3 : vector<8x128xf32>
    %c0_3 = arith.constant 0 : index
    %c1 = arith.constant 1 : index
    %5 = vector.load %arg1[%c0_3, %c1] : memref<8x5xf32, #tpu.memory_space<vmem>>, vector<8x1xf32>
    %c1_4 = arith.constant 1 : index
    %c0_5 = arith.constant 0 : index
    %6 = vector.load %arg2[%c1_4, %c0_5] : memref<5x128xf32, #tpu.memory_space<vmem>>, vector<1x128xf32>
    %7 = vector.broadcast %5 : vector<8x1xf32> to vector<8x128xf32>
    %8 = vector.broadcast %6 : vector<1x128xf32> to vector<8x128xf32>
    %9 = arith.mulf %7, %8 : vector<8x128xf32>
    %10 = arith.addf %4, %9 : vector<8x128xf32>
    %c0_6 = arith.constant 0 : index
    %c2 = arith.constant 2 : index
    %11 = vector.load %arg1[%c0_6, %c2] : memref<8x5xf32, #tpu.memory_space<vmem>>, vector<8x1xf32>
    %c2_7 = arith.constant 2 : index
    %c0_8 = arith.constant 0 : index
    %12 = vector.load %arg2[%c2_7, %c0_8] : memref<5x128xf32, #tpu.memory_space<vmem>>, vector<1x128xf32>
    %13 = vector.broadcast %11 : vector<8x1xf32> to vector<8x128xf32>
    %14 = vector.broadcast %12 : vector<1x128xf32> to vector<8x128xf32>
    %15 = arith.mulf %13, %14 : vector<8x128xf32>
    %16 = arith.addf %10, %15 : vector<8x128xf32>
    %c0_9 = arith.constant 0 : index
    %c3 = arith.constant 3 : index
    %17 = vector.load %arg1[%c0_9, %c3] : memref<8x5xf32, #tpu.memory_space<vmem>>, vector<8x1xf32>
    %c3_10 = arith.constant 3 : index
    %c0_11 = arith.constant 0 : index
    %18 = vector.load %arg2[%c3_10, %c0_11] : memref<5x128xf32, #tpu.memory_space<vmem>>, vector<1x128xf32>
    %19 = vector.broadcast %17 : vector<8x1xf32> to vector<8x128xf32>
    %20 = vector.broadcast %18 : vector<1x128xf32> to vector<8x128xf32>
    %21 = arith.mulf %19, %20 : vector<8x128xf32>
    %22 = arith.addf %16, %21 : vector<8x128xf32>
    %c0_12 = arith.constant 0 : index
    %c4 = arith.constant 4 : index
    %23 = vector.load %arg1[%c0_12, %c4] : memref<8x5xf32, #tpu.memory_space<vmem>>, vector<8x1xf32>
    %c4_13 = arith.constant 4 : index
    %c0_14 = arith.constant 0 : index
    %24 = vector.load %arg2[%c4_13, %c0_14] : memref<5x128xf32, #tpu.memory_space<vmem>>, vector<1x128xf32>
    %25 = vector.broadcast %23 : vector<8x1xf32> to vector<8x128xf32>
    %26 = vector.broadcast %24 : vector<1x128xf32> to vector<8x128xf32>
    %27 = arith.mulf %25, %26 : vector<8x128xf32>
    %28 = arith.addf %22, %27 : vector<8x128xf32>
    %c0_15 = arith.constant 0 : index
    %c0_16 = arith.constant 0 : index
    %29 = vector.load %arg3[%c0_15, %c0_16] : memref<1x128xf32, #tpu.memory_space<vmem>>, vector<1x128xf32>
    %30 = vector.broadcast %29 : vector<1x128xf32> to vector<8x128xf32>
    %31 = arith.addf %28, %30 : vector<8x128xf32>
    %cst = arith.constant 0.000000e+00 : f32
    %32 = vector.broadcast %cst : f32 to vector<8x128xf32>
    %33 = arith.maximumf %31, %32 : vector<8x128xf32>
    %34 = arith.truncf %33 : vector<8x128xf32> to vector<8x128xbf16>
    %c0_17 = arith.constant 0 : index
    %c0_18 = arith.constant 0 : index
    %c0_19 = arith.constant 0 : index
    %35 = vector.load %arg4[%c0_17, %c0_18, %c0_19] : memref<7x128x128xbf16, #tpu.memory_space<vmem>>, vector<1x128x128xbf16>
    %36 = vector.shape_cast %35 : vector<1x128x128xbf16> to vector<128x128xbf16>
    %cst_20 = arith.constant dense<0.000000e+00> : vector<8x128xf32>
    %37 = tpu.matmul %34, %36, %cst_20 {dimension_numbers = #tpu.dot_dimension_numbers<[1], [0], [0], [1], [0, 0, 1, 1], [], []>} : vector<8x128xbf16>, vector<128x128xbf16>, vector<8x128xf32> -> vector<8x128xf32>
    %cst_21 = arith.constant 0.000000e+00 : f32
    %38 = vector.broadcast %cst_21 : f32 to vector<8x128xf32>
    %39 = arith.maximumf %37, %38 : vector<8x128xf32>
    %40 = arith.truncf %39 : vector<8x128xf32> to vector<8x128xbf16>
    %c1_22 = arith.constant 1 : index
    %c0_23 = arith.constant 0 : index
    %c0_24 = arith.constant 0 : index
    %41 = vector.load %arg4[%c1_22, %c0_23, %c0_24] : memref<7x128x128xbf16, #tpu.memory_space<vmem>>, vector<1x128x128xbf16>
    %42 = vector.shape_cast %41 : vector<1x128x128xbf16> to vector<128x128xbf16>
    %cst_25 = arith.constant dense<0.000000e+00> : vector<8x128xf32>
    %43 = tpu.matmul %40, %42, %cst_25 {dimension_numbers = #tpu.dot_dimension_numbers<[1], [0], [0], [1], [0, 0, 1, 1], [], []>} : vector<8x128xbf16>, vector<128x128xbf16>, vector<8x128xf32> -> vector<8x128xf32>
    %cst_26 = arith.constant 0.000000e+00 : f32
    %44 = vector.broadcast %cst_26 : f32 to vector<8x128xf32>
    %45 = arith.maximumf %43, %44 : vector<8x128xf32>
    %46 = arith.truncf %45 : vector<8x128xf32> to vector<8x128xbf16>
    %c2_27 = arith.constant 2 : index
    %c0_28 = arith.constant 0 : index
    %c0_29 = arith.constant 0 : index
    %47 = vector.load %arg4[%c2_27, %c0_28, %c0_29] : memref<7x128x128xbf16, #tpu.memory_space<vmem>>, vector<1x128x128xbf16>
    %48 = vector.shape_cast %47 : vector<1x128x128xbf16> to vector<128x128xbf16>
    %cst_30 = arith.constant dense<0.000000e+00> : vector<8x128xf32>
    %49 = tpu.matmul %46, %48, %cst_30 {dimension_numbers = #tpu.dot_dimension_numbers<[1], [0], [0], [1], [0, 0, 1, 1], [], []>} : vector<8x128xbf16>, vector<128x128xbf16>, vector<8x128xf32> -> vector<8x128xf32>
    %cst_31 = arith.constant 0.000000e+00 : f32
    %50 = vector.broadcast %cst_31 : f32 to vector<8x128xf32>
    %51 = arith.maximumf %49, %50 : vector<8x128xf32>
    %52 = vector.extract_strided_slice %51 {offsets = [0, 0], sizes = [8, 4], strides = [1, 1]} : vector<8x128xf32> to vector<8x4xf32>
    %c0_32 = arith.constant 0 : index
    %c0_33 = arith.constant 0 : index
    %53 = vector.load %arg5[%c0_32, %c0_33] : memref<8x4xf32, #tpu.memory_space<vmem>>, vector<8x4xf32>
    tpu.vector_store %arg5[%c0_32, %c0_33], %52 {strides = array<i32>} : memref<8x4xf32, #tpu.memory_space<vmem>>, vector<8x4xf32>,
    %54 = arith.truncf %51 : vector<8x128xf32> to vector<8x128xbf16>
    %c3_34 = arith.constant 3 : index
    %c0_35 = arith.constant 0 : index
    %c0_36 = arith.constant 0 : index
    %55 = vector.load %arg4[%c3_34, %c0_35, %c0_36] : memref<7x128x128xbf16, #tpu.memory_space<vmem>>, vector<1x128x128xbf16>
    %56 = vector.shape_cast %55 : vector<1x128x128xbf16> to vector<128x128xbf16>
    %cst_37 = arith.constant dense<0.000000e+00> : vector<8x128xf32>
    %57 = tpu.matmul %54, %56, %cst_37 {dimension_numbers = #tpu.dot_dimension_numbers<[1], [0], [0], [1], [0, 0, 1, 1], [], []>} : vector<8x128xbf16>, vector<128x128xbf16>, vector<8x128xf32> -> vector<8x128xf32>
    %cst_38 = arith.constant 0.000000e+00 : f32
    %58 = vector.broadcast %cst_38 : f32 to vector<8x128xf32>
    %59 = arith.maximumf %57, %58 : vector<8x128xf32>
    %60 = arith.truncf %59 : vector<8x128xf32> to vector<8x128xbf16>
    %c4_39 = arith.constant 4 : index
    %c0_40 = arith.constant 0 : index
    %c0_41 = arith.constant 0 : index
    %61 = vector.load %arg4[%c4_39, %c0_40, %c0_41] : memref<7x128x128xbf16, #tpu.memory_space<vmem>>, vector<1x128x128xbf16>
    %62 = vector.shape_cast %61 : vector<1x128x128xbf16> to vector<128x128xbf16>
    %cst_42 = arith.constant dense<0.000000e+00> : vector<8x128xf32>
    %63 = tpu.matmul %60, %62, %cst_42 {dimension_numbers = #tpu.dot_dimension_numbers<[1], [0], [0], [1], [0, 0, 1, 1], [], []>} : vector<8x128xbf16>, vector<128x128xbf16>, vector<8x128xf32> -> vector<8x128xf32>
    %cst_43 = arith.constant 0.000000e+00 : f32
    %64 = vector.broadcast %cst_43 : f32 to vector<8x128xf32>
    %65 = arith.maximumf %63, %64 : vector<8x128xf32>
    %66 = arith.truncf %65 : vector<8x128xf32> to vector<8x128xbf16>
    %c5 = arith.constant 5 : index
    %c0_44 = arith.constant 0 : index
    %c0_45 = arith.constant 0 : index
    %67 = vector.load %arg4[%c5, %c0_44, %c0_45] : memref<7x128x128xbf16, #tpu.memory_space<vmem>>, vector<1x128x128xbf16>
    %68 = vector.shape_cast %67 : vector<1x128x128xbf16> to vector<128x128xbf16>
    %cst_46 = arith.constant dense<0.000000e+00> : vector<8x128xf32>
    %69 = tpu.matmul %66, %68, %cst_46 {dimension_numbers = #tpu.dot_dimension_numbers<[1], [0], [0], [1], [0, 0, 1, 1], [], []>} : vector<8x128xbf16>, vector<128x128xbf16>, vector<8x128xf32> -> vector<8x128xf32>
    %cst_47 = arith.constant 0.000000e+00 : f32
    %70 = vector.broadcast %cst_47 : f32 to vector<8x128xf32>
    %71 = arith.maximumf %69, %70 : vector<8x128xf32>
    %72 = arith.truncf %71 : vector<8x128xf32> to vector<8x128xbf16>
    %c6 = arith.constant 6 : index
    %c0_48 = arith.constant 0 : index
    %c0_49 = arith.constant 0 : index
    %73 = vector.load %arg4[%c6, %c0_48, %c0_49] : memref<7x128x128xbf16, #tpu.memory_space<vmem>>, vector<1x128x128xbf16>
    %74 = vector.shape_cast %73 : vector<1x128x128xbf16> to vector<128x128xbf16>
    %cst_50 = arith.constant dense<0.000000e+00> : vector<8x128xf32>
    %75 = tpu.matmul %72, %74, %cst_50 {dimension_numbers = #tpu.dot_dimension_numbers<[1], [0], [0], [1], [0, 0, 1, 1], [], []>} : vector<8x128xbf16>, vector<128x128xbf16>, vector<8x128xf32> -> vector<8x128xf32>
    %cst_51 = arith.constant 0.000000e+00 : f32
    %76 = vector.broadcast %cst_51 : f32 to vector<8x128xf32>
    %77 = arith.maximumf %75, %76 : vector<8x128xf32>
    %78 = vector.extract_strided_slice %77 {offsets = [0, 0], sizes = [8, 4], strides = [1, 1]} : vector<8x128xf32> to vector<8x4xf32>
    %c0_52 = arith.constant 0 : index
    %c0_53 = arith.constant 0 : index
    %79 = vector.load %arg6[%c0_52, %c0_53] : memref<8x4xf32, #tpu.memory_space<vmem>>, vector<8x4xf32>
    tpu.vector_store %arg6[%c0_52, %c0_53], %78 {strides = array<i32>} : memref<8x4xf32, #tpu.memory_space<vmem>>, vector<8x4xf32>,
    return
  }
  func.func @transform_0(%arg0: i32) -> (i32, i32) {
    %c0_i32 = arith.constant 0 : i32
    %c0_i32_0 = arith.constant 0 : i32
    return %arg0, %c0_i32 : i32, i32
  }
  func.func @transform_1(%arg0: i32) -> (i32, i32) {
    %c0_i32 = arith.constant 0 : i32
    %c0_i32_0 = arith.constant 0 : i32
    %c0_i32_1 = arith.constant 0 : i32
    return %c0_i32, %c0_i32_0 : i32, i32
  }
  func.func @transform_2(%arg0: i32) -> (i32, i32) {
    %c0_i32 = arith.constant 0 : i32
    %c0_i32_0 = arith.constant 0 : i32
    %c0_i32_1 = arith.constant 0 : i32
    return %c0_i32, %c0_i32_0 : i32, i32
  }
  func.func @transform_3(%arg0: i32) -> (i32, i32, i32) {
    %c0_i32 = arith.constant 0 : i32
    %c0_i32_0 = arith.constant 0 : i32
    %c0_i32_1 = arith.constant 0 : i32
    %c0_i32_2 = arith.constant 0 : i32
    return %c0_i32, %c0_i32_0, %c0_i32_1 : i32, i32, i32
  }
  func.func @transform_4(%arg0: i32) -> (i32, i32) {
    %c0_i32 = arith.constant 0 : i32
    %c0_i32_0 = arith.constant 0 : i32
    return %arg0, %c0_i32 : i32, i32
  }
  func.func @transform_5(%arg0: i32) -> (i32, i32) {
    %c0_i32 = arith.constant 0 : i32
    %c0_i32_0 = arith.constant 0 : i32
    return %arg0, %c0_i32 : i32, i32
  }
}

</mosaic_0001>

<llo_original>
// kernel: autoencoder_forward.1
$region0: #{autoencoder_forward.1}
  #allocation0 [shape = 'u32[]', space=smem, size = 0x4, offset = 0x4, fixed_abs, tag = 'smem constant byte address 0x4 - core index']
  #allocation1 [shape = 'u32[144,128]{1,0:T(1,128)}', space=vmem, size = 0x12000, scoped, tag = 'internal scratch']
  %s0 = inlined_call_operand.hbm [shape: f32[8,5], index: 0, kind: input, shape index: {}]
  %s1 = inlined_call_operand.hbm [shape: f32[5,128], index: 1, kind: input, shape index: {}]
  %s2 = inlined_call_operand.vmem [shape: f32[1,128], index: 2, kind: input, shape index: {}]
  %s3 = inlined_call_operand.hbm [shape: bf16[7,128,128], index: 3, kind: input, shape index: {}]
  %s4 = inlined_call_operand.vmem [shape: f32[8,4], index: 4, kind: output, shape index: {0}]
  %s5 = inlined_call_operand.vmem [shape: f32[8,4], index: 5, kind: output, shape index: {1}]
  %6 = xla_tuple %s4, %s5
  %s7 = sld [smem:[#allocation0]]
  $region46: #{autoencoder_forward.1} parent=0
    _
  %s9 = ssub.s32 1, %s7
  %s10 = scalar_select 0, %s9, %s7
  $region1: #{autoencoder_forward.1} parent=0
    #allocation2 [shape = 'u8[4096]{0}', space=vmem, size = 0x1000, scoped, tag = 'input window, operand 0, single buffered']
    #allocation3 [shape = 's32[1]{0}', space=sflag, size = 0x4, scoped, tag = 'scoped memory for autoencoder_forward.1']
    #allocation4 [shape = 'u8[4096]{0}', space=vmem, size = 0x1000, scoped, tag = 'input window, operand 1, single buffered']
    #allocation5 [shape = 's32[1]{0}', space=sflag, size = 0x4, scoped, tag = 'scoped memory for autoencoder_forward.1']
    #allocation6 [shape = 'u8[229376]{0}', space=vmem, size = 0x38000, scoped, tag = 'input window, operand 3, single buffered']
    %11 = vsyncpa [#allocation3], 0
    %12 = vsyncpa [#allocation5], 0
    // Predicated region
    $region2: #{autoencoder_forward.1} parent=1 // pred_check
      _
    $region3: #{autoencoder_forward.1} parent=1 // pred_check_branch
      %14 = sbr.rel (0) target = $region5
    $region4: #{autoencoder_forward.1} parent=1 // pred_region
      %s16 = ssub.s32 128, 128
      %17 = vsyncadd [#allocation3], %s16
      %s19 = sshll.u32 [#allocation2], 4
      %s20 = int_to_ptr.vmem [resolvable:$true] %s19
      %22 = dma.hbm_to_vmem [thread:$0]  %s0, 128, %s20, [#allocation3]
    $region5: #{autoencoder_forward.1} parent=1 // pred_fallthru
      _
    // Predicated region
    $region6: #{autoencoder_forward.1} parent=1 // pred_check
      _
    $region7: #{autoencoder_forward.1} parent=1 // pred_check_branch
      %24 = sbr.rel (0) target = $region9
    $region8: #{autoencoder_forward.1} parent=1 // pred_region
      %s26 = ssub.s32 128, 128
      %27 = vsyncadd [#allocation5], %s26
      %s29 = sshll.u32 [#allocation4], 4
      %s30 = int_to_ptr.vmem [resolvable:$true] %s29
      %32 = dma.hbm_to_vmem [thread:$0]  %s1, 128, %s30, [#allocation5]
    $region9: #{autoencoder_forward.1} parent=1 // pred_fallthru
      _
    // Predicated region
    $region10: #{autoencoder_forward.1} parent=1 // pred_check
      _
    $region11: #{autoencoder_forward.1} parent=1 // pred_check_branch
      %34 = sbr.rel (0) target = $region13
    $region12: #{autoencoder_forward.1} parent=1 // pred_region
      _
    $region13: #{autoencoder_forward.1} parent=1 // pred_fallthru
      _
    // Predicated region
    $region14: #{autoencoder_forward.1} parent=1 // pred_check
      _
    $region15: #{autoencoder_forward.1} parent=1 // pred_check_branch
      %36 = sbr.rel (0) target = $region17
    $region16: #{autoencoder_forward.1} parent=1 // pred_region
      %s38 = ssub.s32 7168, 7168
      %39 = vsyncadd [#allocation5], %s38
      %s40 = sshll.u32 [#allocation6], 4
      %s41 = int_to_ptr.vmem [resolvable:$true] %s40
      %46 = dma.hbm_to_vmem [thread:$0]  %s3, 7168, %s41, [#allocation5], 64, 64, 4
    $region17: #{autoencoder_forward.1} parent=1 // pred_fallthru
      _
    // Predicated region
    $region18: #{autoencoder_forward.1} parent=1 // pred_check
      _
    $region19: #{autoencoder_forward.1} parent=1 // pred_check_branch
      %48 = sbr.rel (0) target = $region21
    $region20: #{autoencoder_forward.1} parent=1 // pred_region
      %49 = dma.done [#allocation3], 128
    $region21: #{autoencoder_forward.1} parent=1 // pred_fallthru
      _
    // Predicated region
    $region22: #{autoencoder_forward.1} parent=1 // pred_check
      _
    $region23: #{autoencoder_forward.1} parent=1 // pred_check_branch
      %51 = sbr.rel (0) target = $region25
    $region24: #{autoencoder_forward.1} parent=1 // pred_region
      %52 = dma.done [#allocation5], 128
    $region25: #{autoencoder_forward.1} parent=1 // pred_fallthru
      _
    // Predicated region
    $region26: #{autoencoder_forward.1} parent=1 // pred_check
      _
    $region27: #{autoencoder_forward.1} parent=1 // pred_check_branch
      %54 = sbr.rel (0) target = $region29
    $region28: #{autoencoder_forward.1} parent=1 // pred_region
      %55 = dma.done [#allocation5], 7168
    $region29: #{autoencoder_forward.1} parent=1 // pred_fallthru
      _
    %v57 = vld [vmem:[#allocation2] sm:$0xff]
    %v58 = vld [vmem:[#allocation4] sm:$0x1]
    %60 = vset.pattern.permute.xlu0 0
    %61 = vperm.xlu0 %60, %v57
    %v62 = vpop.permute.xlu0 %61
    %v64 = vlaneseq
    %v65 = vshrl.u32 %v64, 7
    %v66 = vsub.s32 0, %v65
    %v67 = vrot.slane %v58, %v66
    %v68 = vmul.f32 %v62, %v67
    %v69 = vld [vmem:[#allocation4 + $0x1] sm:$0x1]
    %70 = vset.pattern.permute.xlu0 1
    %71 = vperm.xlu0 %70, %v57
    %v72 = vpop.permute.xlu0 %71
    %v74 = vlaneseq
    %v75 = vshrl.u32 %v74, 7
    %v76 = vsub.s32 0, %v75
    %v77 = vrot.slane %v69, %v76
    %v78 = vmul.f32 %v72, %v77
    %v79 = vadd.f32 %v68, %v78
    %v80 = vld [vmem:[#allocation4 + $0x2] sm:$0x1]
    %81 = vset.pattern.permute.xlu0 2
    %82 = vperm.xlu0 %81, %v57
    %v83 = vpop.permute.xlu0 %82
    %v85 = vlaneseq
    %v86 = vshrl.u32 %v85, 7
    %v87 = vsub.s32 0, %v86
    %v88 = vrot.slane %v80, %v87
    %v89 = vmul.f32 %v83, %v88
    %v90 = vadd.f32 %v79, %v89
    %v91 = vld [vmem:[#allocation4 + $0x3] sm:$0x1]
    %92 = vset.pattern.permute.xlu0 3
    %93 = vperm.xlu0 %92, %v57
    %v94 = vpop.permute.xlu0 %93
    %v96 = vlaneseq
    %v97 = vshrl.u32 %v96, 7
    %v98 = vsub.s32 0, %v97
    %v99 = vrot.slane %v91, %v98
    %v100 = vmul.f32 %v94, %v99
    %v101 = vadd.f32 %v90, %v100
    %v102 = vld [vmem:[#allocation4 + $0x4] sm:$0x1]
    %103 = vset.pattern.permute.xlu0 4
    %104 = vperm.xlu0 %103, %v57
    %v105 = vpop.permute.xlu0 %104
    %v107 = vlaneseq
    %v108 = vshrl.u32 %v107, 7
    %v109 = vsub.s32 0, %v108
    %v110 = vrot.slane %v102, %v109
    %v111 = vmul.f32 %v105, %v110
    %v112 = vadd.f32 %v101, %v111
    %v113 = vld [vmem:[%s2] sm:$0x1]
    %v115 = vlaneseq
    %v116 = vshrl.u32 %v115, 7
    %v117 = vsub.s32 0, %v116
    %v118 = vrot.slane %v113, %v117
    %v120 = vadd.f32 %v112, %v118
    %v121 = vmax.f32 %v120, 0.0
    %v122 = vpack.c.bf16 %v121, %v121
    %v123 = vld [vmem:[#allocation6] sm:$0xf]
    %v124 = vld [vmem:[#allocation6 + $0x4] sm:$0xf]
    %v125 = vld [vmem:[#allocation6 + $0x8] sm:$0xf]
    %v126 = vld [vmem:[#allocation6 + $0xc] sm:$0xf]
    %v127 = vld [vmem:[#allocation6 + $0x10] sm:$0xf]
    %v128 = vld [vmem:[#allocation6 + $0x14] sm:$0xf]
    %v129 = vld [vmem:[#allocation6 + $0x18] sm:$0xf]
    %v130 = vld [vmem:[#allocation6 + $0x1c] sm:$0xf]
    %v131 = vld [vmem:[#allocation6 + $0x20] sm:$0xf]
    %v132 = vld [vmem:[#allocation6 + $0x24] sm:$0xf]
    %v133 = vld [vmem:[#allocation6 + $0x28] sm:$0xf]
    %v134 = vld [vmem:[#allocation6 + $0x2c] sm:$0xf]
    %v135 = vld [vmem:[#allocation6 + $0x30] sm:$0xf]
    %v136 = vld [vmem:[#allocation6 + $0x34] sm:$0xf]
    %v137 = vld [vmem:[#allocation6 + $0x38] sm:$0xf]
    %v138 = vld [vmem:[#allocation6 + $0x3c] sm:$0xf]
    %v155 = vunpack.c.l.b16 %v123
    %v156 = vunpack.c.l.b16 %v124
    %v157 = vunpack.c.l.b16 %v125
    %v158 = vunpack.c.l.b16 %v126
    %v159 = vunpack.c.l.b16 %v127
    %v160 = vunpack.c.l.b16 %v128
    %v161 = vunpack.c.l.b16 %v129
    %v162 = vunpack.c.l.b16 %v130
    %v163 = vunpack.c.l.b16 %v131
    %v164 = vunpack.c.l.b16 %v132
    %v165 = vunpack.c.l.b16 %v133
    %v166 = vunpack.c.l.b16 %v134
    %v167 = vunpack.c.l.b16 %v135
    %v168 = vunpack.c.l.b16 %v136
    %v169 = vunpack.c.l.b16 %v137
    %v170 = vunpack.c.l.b16 %v138
    %v171 = vpack.c.b16 %v156, %v155
    %v172 = vpack.c.b16 %v158, %v157
    %v173 = vpack.c.b16 %v160, %v159
    %v174 = vpack.c.b16 %v162, %v161
    %v175 = vpack.c.b16 %v164, %v163
    %v176 = vpack.c.b16 %v166, %v165
    %v177 = vpack.c.b16 %v168, %v167
    %v178 = vpack.c.b16 %v170, %v169
    %187 = vmatprep.subr.bf16.mxu0 0
    %188 = vmatpush1.bf16.msra.mxu0 %v171
    %189 = vmatprep.subr.bf16.mxu0 0
    %190 = vmatpush1.bf16.msra.mxu0 %v172
    %191 = vmatprep.subr.bf16.mxu0 0
    %192 = vmatpush1.bf16.msra.mxu0 %v173
    %193 = vmatprep.subr.bf16.mxu0 0
    %194 = vmatpush1.bf16.msra.mxu0 %v174
    %195 = vmatprep.subr.bf16.mxu0 0
    %196 = vmatpush1.bf16.msra.mxu0 %v175
    %197 = vmatprep.subr.bf16.mxu0 0
    %198 = vmatpush1.bf16.msra.mxu0 %v176
    %199 = vmatprep.subr.bf16.mxu0 0
    %200 = vmatpush1.bf16.msra.mxu0 %v177
    %201 = vmatprep.subr.bf16.mxu0 0
    %202 = vmatpush1.bf16.msra.mxu0 %v178
    %203 = vmatprep.subr.bf16.mxu0 0
    %204 = vmatpush1.bf16.msra.mxu0 0
    %205 = vmatprep.subr.bf16.mxu0 0
    %206 = vmatpush1.bf16.msra.mxu0 0
    %207 = vmatprep.subr.bf16.mxu0 0
    %208 = vmatpush1.bf16.msra.mxu0 0
    %209 = vmatprep.subr.bf16.mxu0 0
    %210 = vmatpush1.bf16.msra.mxu0 0
    %211 = vmatprep.subr.bf16.mxu0 0
    %212 = vmatpush1.bf16.msra.mxu0 0
    %213 = vmatprep.subr.bf16.mxu0 0
    %214 = vmatpush1.bf16.msra.mxu0 0
    %215 = vmatprep.subr.bf16.mxu0 0
    %216 = vmatpush1.bf16.msra.mxu0 0
    %217 = vmatprep.subr.bf16.mxu0 0
    %218 = vmatpush1.bf16.msra.mxu0 0
    %219 = vmatprep.mubr.bf16.mxu0 0
    %220 = vmatmul.mubr.bf16.gmra.mrb[0].mxu0 %v122
    %v221 = vpop.f32.mrb[0].mxu0
    %v222 = vadd.f32 0.0, %v221
    %v223 = vpop.f32.mrb[0].mxu0
    %v224 = vpop.f32.mrb[0].mxu0
    %v225 = vpop.f32.mrb[0].mxu0
    %226 = vdwg.mxu0
    %v227 = vmax.f32 %v222, 0.0
    %v228 = vpack.c.bf16 %v227, %v227
    %s229 = scalar_lea.vmem [#allocation6], 64
    %v230 = vld [vmem:[%s229] sm:$0xf]
    %v231 = vld [vmem:[%s229 + $0x4] sm:$0xf]
    %v232 = vld [vmem:[%s229 + $0x8] sm:$0xf]
    %v233 = vld [vmem:[%s229 + $0xc] sm:$0xf]
    %v234 = vld [vmem:[%s229 + $0x10] sm:$0xf]
    %v235 = vld [vmem:[%s229 + $0x14] sm:$0xf]
    %v236 = vld [vmem:[%s229 + $0x18] sm:$0xf]
    %v237 = vld [vmem:[%s229 + $0x1c] sm:$0xf]
    %v238 = vld [vmem:[%s229 + $0x20] sm:$0xf]
    %v239 = vld [vmem:[%s229 + $0x24] sm:$0xf]
    %v240 = vld [vmem:[%s229 + $0x28] sm:$0xf]
    %v241 = vld [vmem:[%s229 + $0x2c] sm:$0xf]
    %v242 = vld [vmem:[%s229 + $0x30] sm:$0xf]
    %v243 = vld [vmem:[%s229 + $0x34] sm:$0xf]
    %v244 = vld [vmem:[%s229 + $0x38] sm:$0xf]
    %v245 = vld [vmem:[%s229 + $0x3c] sm:$0xf]
    %v262 = vunpack.c.l.b16 %v230
    %v263 = vunpack.c.l.b16 %v231
    %v264 = vunpack.c.l.b16 %v232
    %v265 = vunpack.c.l.b16 %v233
    %v266 = vunpack.c.l.b16 %v234
    %v267 = vunpack.c.l.b16 %v235
    %v268 = vunpack.c.l.b16 %v236
    %v269 = vunpack.c.l.b16 %v237
    %v270 = vunpack.c.l.b16 %v238
    %v271 = vunpack.c.l.b16 %v239
    %v272 = vunpack.c.l.b16 %v240
    %v273 = vunpack.c.l.b16 %v241
    %v274 = vunpack.c.l.b16 %v242
    %v275 = vunpack.c.l.b16 %v243
    %v276 = vunpack.c.l.b16 %v244
    %v277 = vunpack.c.l.b16 %v245
    %v278 = vpack.c.b16 %v263, %v262
    %v279 = vpack.c.b16 %v265, %v264
    %v280 = vpack.c.b16 %v267, %v266
    %v281 = vpack.c.b16 %v269, %v268
    %v282 = vpack.c.b16 %v271, %v270
    %v283 = vpack.c.b16 %v273, %v272
    %v284 = vpack.c.b16 %v275, %v274
    %v285 = vpack.c.b16 %v277, %v276
    %294 = vmatprep.subr.bf16.mxu0 0
    %295 = vmatpush1.bf16.msra.mxu0 %v278
    %296 = vmatprep.subr.bf16.mxu0 0
    %297 = vmatpush1.bf16.msra.mxu0 %v279
    %298 = vmatprep.subr.bf16.mxu0 0
    %299 = vmatpush1.bf16.msra.mxu0 %v280
    %300 = vmatprep.subr.bf16.mxu0 0
    %301 = vmatpush1.bf16.msra.mxu0 %v281
    %302 = vmatprep.subr.bf16.mxu0 0
    %303 = vmatpush1.bf16.msra.mxu0 %v282
    %304 = vmatprep.subr.bf16.mxu0 0
    %305 = vmatpush1.bf16.msra.mxu0 %v283
    %306 = vmatprep.subr.bf16.mxu0 0
    %307 = vmatpush1.bf16.msra.mxu0 %v284
    %308 = vmatprep.subr.bf16.mxu0 0
    %309 = vmatpush1.bf16.msra.mxu0 %v285
    %310 = vmatprep.subr.bf16.mxu0 0
    %311 = vmatpush1.bf16.msra.mxu0 0
    %312 = vmatprep.subr.bf16.mxu0 0
    %313 = vmatpush1.bf16.msra.mxu0 0
    %314 = vmatprep.subr.bf16.mxu0 0
    %315 = vmatpush1.bf16.msra.mxu0 0
    %316 = vmatprep.subr.bf16.mxu0 0
    %317 = vmatpush1.bf16.msra.mxu0 0
    %318 = vmatprep.subr.bf16.mxu0 0
    %319 = vmatpush1.bf16.msra.mxu0 0
    %320 = vmatprep.subr.bf16.mxu0 0
    %321 = vmatpush1.bf16.msra.mxu0 0
    %322 = vmatprep.subr.bf16.mxu0 0
    %323 = vmatpush1.bf16.msra.mxu0 0
    %324 = vmatprep.subr.bf16.mxu0 0
    %325 = vmatpush1.bf16.msra.mxu0 0
    %326 = vmatprep.mubr.bf16.mxu0 0
    %327 = vmatmul.mubr.bf16.gmra.mrb[0].mxu0 %v228
    %v328 = vpop.f32.mrb[0].mxu0
    %v329 = vadd.f32 0.0, %v328
    %v330 = vpop.f32.mrb[0].mxu0
    %v331 = vpop.f32.mrb[0].mxu0
    %v332 = vpop.f32.mrb[0].mxu0
    %333 = vdwg.mxu0
    %v334 = vmax.f32 %v329, 0.0
    %v335 = vpack.c.bf16 %v334, %v334
    %s336 = scalar_lea.vmem [#allocation6], 128
    %v337 = vld [vmem:[%s336] sm:$0xf]
    %v338 = vld [vmem:[%s336 + $0x4] sm:$0xf]
    %v339 = vld [vmem:[%s336 + $0x8] sm:$0xf]
    %v340 = vld [vmem:[%s336 + $0xc] sm:$0xf]
    %v341 = vld [vmem:[%s336 + $0x10] sm:$0xf]
    %v342 = vld [vmem:[%s336 + $0x14] sm:$0xf]
    %v343 = vld [vmem:[%s336 + $0x18] sm:$0xf]
    %v344 = vld [vmem:[%s336 + $0x1c] sm:$0xf]
    %v345 = vld [vmem:[%s336 + $0x20] sm:$0xf]
    %v346 = vld [vmem:[%s336 + $0x24] sm:$0xf]
    %v347 = vld [vmem:[%s336 + $0x28] sm:$0xf]
    %v348 = vld [vmem:[%s336 + $0x2c] sm:$0xf]
    %v349 = vld [vmem:[%s336 + $0x30] sm:$0xf]
    %v350 = vld [vmem:[%s336 + $0x34] sm:$0xf]
    %v351 = vld [vmem:[%s336 + $0x38] sm:$0xf]
    %v352 = vld [vmem:[%s336 + $0x3c] sm:$0xf]
    %v369 = vunpack.c.l.b16 %v337
    %v370 = vunpack.c.l.b16 %v338
    %v371 = vunpack.c.l.b16 %v339
    %v372 = vunpack.c.l.b16 %v340
    %v373 = vunpack.c.l.b16 %v341
    %v374 = vunpack.c.l.b16 %v342
    %v375 = vunpack.c.l.b16 %v343
    %v376 = vunpack.c.l.b16 %v344
    %v377 = vunpack.c.l.b16 %v345
    %v378 = vunpack.c.l.b16 %v346
    %v379 = vunpack.c.l.b16 %v347
    %v380 = vunpack.c.l.b16 %v348
    %v381 = vunpack.c.l.b16 %v349
    %v382 = vunpack.c.l.b16 %v350
    %v383 = vunpack.c.l.b16 %v351
    %v384 = vunpack.c.l.b16 %v352
    %v385 = vpack.c.b16 %v370, %v369
    %v386 = vpack.c.b16 %v372, %v371
    %v387 = vpack.c.b16 %v374, %v373
    %v388 = vpack.c.b16 %v376, %v375
    %v389 = vpack.c.b16 %v378, %v377
    %v390 = vpack.c.b16 %v380, %v379
    %v391 = vpack.c.b16 %v382, %v381
    %v392 = vpack.c.b16 %v384, %v383
    %401 = vmatprep.subr.bf16.mxu0 0
    %402 = vmatpush1.bf16.msra.mxu0 %v385
    %403 = vmatprep.subr.bf16.mxu0 0
    %404 = vmatpush1.bf16.msra.mxu0 %v386
    %405 = vmatprep.subr.bf16.mxu0 0
    %406 = vmatpush1.bf16.msra.mxu0 %v387
    %407 = vmatprep.subr.bf16.mxu0 0
    %408 = vmatpush1.bf16.msra.mxu0 %v388
    %409 = vmatprep.subr.bf16.mxu0 0
    %410 = vmatpush1.bf16.msra.mxu0 %v389
    %411 = vmatprep.subr.bf16.mxu0 0
    %412 = vmatpush1.bf16.msra.mxu0 %v390
    %413 = vmatprep.subr.bf16.mxu0 0
    %414 = vmatpush1.bf16.msra.mxu0 %v391
    %415 = vmatprep.subr.bf16.mxu0 0
    %416 = vmatpush1.bf16.msra.mxu0 %v392
    %417 = vmatprep.subr.bf16.mxu0 0
    %418 = vmatpush1.bf16.msra.mxu0 0
    %419 = vmatprep.subr.bf16.mxu0 0
    %420 = vmatpush1.bf16.msra.mxu0 0
    %421 = vmatprep.subr.bf16.mxu0 0
    %422 = vmatpush1.bf16.msra.mxu0 0
    %423 = vmatprep.subr.bf16.mxu0 0
    %424 = vmatpush1.bf16.msra.mxu0 0
    %425 = vmatprep.subr.bf16.mxu0 0
    %426 = vmatpush1.bf16.msra.mxu0 0
    %427 = vmatprep.subr.bf16.mxu0 0
    %428 = vmatpush1.bf16.msra.mxu0 0
    %429 = vmatprep.subr.bf16.mxu0 0
    %430 = vmatpush1.bf16.msra.mxu0 0
    %431 = vmatprep.subr.bf16.mxu0 0
    %432 = vmatpush1.bf16.msra.mxu0 0
    %433 = vmatprep.mubr.bf16.mxu0 0
    %434 = vmatmul.mubr.bf16.gmra.mrb[0].mxu0 %v335
    %v435 = vpop.f32.mrb[0].mxu0
    %v436 = vadd.f32 0.0, %v435
    %v437 = vpop.f32.mrb[0].mxu0
    %v438 = vpop.f32.mrb[0].mxu0
    %v439 = vpop.f32.mrb[0].mxu0
    %440 = vdwg.mxu0
    %v441 = vmax.f32 %v436, 0.0
    %vm442 = vcmask 31744
    %443 = vst.msk [vmem:[%s4] sm:$0xff] %vm442, %v441
    %v444 = vpack.c.bf16 %v441, %v441
    %s445 = scalar_lea.vmem [#allocation6], 192
    %v446 = vld [vmem:[%s445] sm:$0xf]
    %v447 = vld [vmem:[%s445 + $0x4] sm:$0xf]
    %v448 = vld [vmem:[%s445 + $0x8] sm:$0xf]
    %v449 = vld [vmem:[%s445 + $0xc] sm:$0xf]
    %v450 = vld [vmem:[%s445 + $0x10] sm:$0xf]
    %v451 = vld [vmem:[%s445 + $0x14] sm:$0xf]
    %v452 = vld [vmem:[%s445 + $0x18] sm:$0xf]
    %v453 = vld [vmem:[%s445 + $0x1c] sm:$0xf]
    %v454 = vld [vmem:[%s445 + $0x20] sm:$0xf]
    %v455 = vld [vmem:[%s445 + $0x24] sm:$0xf]
    %v456 = vld [vmem:[%s445 + $0x28] sm:$0xf]
    %v457 = vld [vmem:[%s445 + $0x2c] sm:$0xf]
    %v458 = vld [vmem:[%s445 + $0x30] sm:$0xf]
    %v459 = vld [vmem:[%s445 + $0x34] sm:$0xf]
    %v460 = vld [vmem:[%s445 + $0x38] sm:$0xf]
    %v461 = vld [vmem:[%s445 + $0x3c] sm:$0xf]
    %v478 = vunpack.c.l.b16 %v446
    %v479 = vunpack.c.l.b16 %v447
    %v480 = vunpack.c.l.b16 %v448
    %v481 = vunpack.c.l.b16 %v449
    %v482 = vunpack.c.l.b16 %v450
    %v483 = vunpack.c.l.b16 %v451
    %v484 = vunpack.c.l.b16 %v452
    %v485 = vunpack.c.l.b16 %v453
    %v486 = vunpack.c.l.b16 %v454
    %v487 = vunpack.c.l.b16 %v455
    %v488 = vunpack.c.l.b16 %v456
    %v489 = vunpack.c.l.b16 %v457
    %v490 = vunpack.c.l.b16 %v458
    %v491 = vunpack.c.l.b16 %v459
    %v492 = vunpack.c.l.b16 %v460
    %v493 = vunpack.c.l.b16 %v461
    %v494 = vpack.c.b16 %v479, %v478
    %v495 = vpack.c.b16 %v481, %v480
    %v496 = vpack.c.b16 %v483, %v482
    %v497 = vpack.c.b16 %v485, %v484
    %v498 = vpack.c.b16 %v487, %v486
    %v499 = vpack.c.b16 %v489, %v488
    %v500 = vpack.c.b16 %v491, %v490
    %v501 = vpack.c.b16 %v493, %v492
    %510 = vmatprep.subr.bf16.mxu0 0
    %511 = vmatpush1.bf16.msra.mxu0 %v494
    %512 = vmatprep.subr.bf16.mxu0 0
    %513 = vmatpush1.bf16.msra.mxu0 %v495
    %514 = vmatprep.subr.bf16.mxu0 0
    %515 = vmatpush1.bf16.msra.mxu0 %v496
    %516 = vmatprep.subr.bf16.mxu0 0
    %517 = vmatpush1.bf16.msra.mxu0 %v497
    %518 = vmatprep.subr.bf16.mxu0 0
    %519 = vmatpush1.bf16.msra.mxu0 %v498
    %520 = vmatprep.subr.bf16.mxu0 0
    %521 = vmatpush1.bf16.msra.mxu0 %v499
    %522 = vmatprep.subr.bf16.mxu0 0
    %523 = vmatpush1.bf16.msra.mxu0 %v500
    %524 = vmatprep.subr.bf16.mxu0 0
    %525 = vmatpush1.bf16.msra.mxu0 %v501
    %526 = vmatprep.subr.bf16.mxu0 0
    %527 = vmatpush1.bf16.msra.mxu0 0
    %528 = vmatprep.subr.bf16.mxu0 0
    %529 = vmatpush1.bf16.msra.mxu0 0
    %530 = vmatprep.subr.bf16.mxu0 0
    %531 = vmatpush1.bf16.msra.mxu0 0
    %532 = vmatprep.subr.bf16.mxu0 0
    %533 = vmatpush1.bf16.msra.mxu0 0
    %534 = vmatprep.subr.bf16.mxu0 0
    %535 = vmatpush1.bf16.msra.mxu0 0
    %536 = vmatprep.subr.bf16.mxu0 0
    %537 = vmatpush1.bf16.msra.mxu0 0
    %538 = vmatprep.subr.bf16.mxu0 0
    %539 = vmatpush1.bf16.msra.mxu0 0
    %540 = vmatprep.subr.bf16.mxu0 0
    %541 = vmatpush1.bf16.msra.mxu0 0
    %542 = vmatprep.mubr.bf16.mxu0 0
    %543 = vmatmul.mubr.bf16.gmra.mrb[0].mxu0 %v444
    %v544 = vpop.f32.mrb[0].mxu0
    %v545 = vadd.f32 0.0, %v544
    %v546 = vpop.f32.mrb[0].mxu0
    %v547 = vpop.f32.mrb[0].mxu0
    %v548 = vpop.f32.mrb[0].mxu0
    %549 = vdwg.mxu0
    %v550 = vmax.f32 %v545, 0.0
    %v551 = vpack.c.bf16 %v550, %v550
    %s552 = scalar_lea.vmem [#allocation6], 256
    %v553 = vld [vmem:[%s552] sm:$0xf]
    %v554 = vld [vmem:[%s552 + $0x4] sm:$0xf]
    %v555 = vld [vmem:[%s552 + $0x8] sm:$0xf]
    %v556 = vld [vmem:[%s552 + $0xc] sm:$0xf]
    %v557 = vld [vmem:[%s552 + $0x10] sm:$0xf]
    %v558 = vld [vmem:[%s552 + $0x14] sm:$0xf]
    %v559 = vld [vmem:[%s552 + $0x18] sm:$0xf]
    %v560 = vld [vmem:[%s552 + $0x1c] sm:$0xf]
    %v561 = vld [vmem:[%s552 + $0x20] sm:$0xf]
    %v562 = vld [vmem:[%s552 + $0x24] sm:$0xf]
    %v563 = vld [vmem:[%s552 + $0x28] sm:$0xf]
    %v564 = vld [vmem:[%s552 + $0x2c] sm:$0xf]
    %v565 = vld [vmem:[%s552 + $0x30] sm:$0xf]
    %v566 = vld [vmem:[%s552 + $0x34] sm:$0xf]
    %v567 = vld [vmem:[%s552 + $0x38] sm:$0xf]
    %v568 = vld [vmem:[%s552 + $0x3c] sm:$0xf]
    %v585 = vunpack.c.l.b16 %v553
    %v586 = vunpack.c.l.b16 %v554
    %v587 = vunpack.c.l.b16 %v555
    %v588 = vunpack.c.l.b16 %v556
    %v589 = vunpack.c.l.b16 %v557
    %v590 = vunpack.c.l.b16 %v558
    %v591 = vunpack.c.l.b16 %v559
    %v592 = vunpack.c.l.b16 %v560
    %v593 = vunpack.c.l.b16 %v561
    %v594 = vunpack.c.l.b16 %v562
    %v595 = vunpack.c.l.b16 %v563
    %v596 = vunpack.c.l.b16 %v564
    %v597 = vunpack.c.l.b16 %v565
    %v598 = vunpack.c.l.b16 %v566
    %v599 = vunpack.c.l.b16 %v567
    %v600 = vunpack.c.l.b16 %v568
    %v601 = vpack.c.b16 %v586, %v585
    %v602 = vpack.c.b16 %v588, %v587
    %v603 = vpack.c.b16 %v590, %v589
    %v604 = vpack.c.b16 %v592, %v591
    %v605 = vpack.c.b16 %v594, %v593
    %v606 = vpack.c.b16 %v596, %v595
    %v607 = vpack.c.b16 %v598, %v597
    %v608 = vpack.c.b16 %v600, %v599
    %617 = vmatprep.subr.bf16.mxu0 0
    %618 = vmatpush1.bf16.msra.mxu0 %v601
    %619 = vmatprep.subr.bf16.mxu0 0
    %620 = vmatpush1.bf16.msra.mxu0 %v602
    %621 = vmatprep.subr.bf16.mxu0 0
    %622 = vmatpush1.bf16.msra.mxu0 %v603
    %623 = vmatprep.subr.bf16.mxu0 0
    %624 = vmatpush1.bf16.msra.mxu0 %v604
    %625 = vmatprep.subr.bf16.mxu0 0
    %626 = vmatpush1.bf16.msra.mxu0 %v605
    %627 = vmatprep.subr.bf16.mxu0 0
    %628 = vmatpush1.bf16.msra.mxu0 %v606
    %629 = vmatprep.subr.bf16.mxu0 0
    %630 = vmatpush1.bf16.msra.mxu0 %v607
    %631 = vmatprep.subr.bf16.mxu0 0
    %632 = vmatpush1.bf16.msra.mxu0 %v608
    %633 = vmatprep.subr.bf16.mxu0 0
    %634 = vmatpush1.bf16.msra.mxu0 0
    %635 = vmatprep.subr.bf16.mxu0 0
    %636 = vmatpush1.bf16.msra.mxu0 0
    %637 = vmatprep.subr.bf16.mxu0 0
    %638 = vmatpush1.bf16.msra.mxu0 0
    %639 = vmatprep.subr.bf16.mxu0 0
    %640 = vmatpush1.bf16.msra.mxu0 0
    %641 = vmatprep.subr.bf16.mxu0 0
    %642 = vmatpush1.bf16.msra.mxu0 0
    %643 = vmatprep.subr.bf16.mxu0 0
    %644 = vmatpush1.bf16.msra.mxu0 0
    %645 = vmatprep.subr.bf16.mxu0 0
    %646 = vmatpush1.bf16.msra.mxu0 0
    %647 = vmatprep.subr.bf16.mxu0 0
    %648 = vmatpush1.bf16.msra.mxu0 0
    %649 = vmatprep.mubr.bf16.mxu0 0
    %650 = vmatmul.mubr.bf16.gmra.mrb[0].mxu0 %v551
    %v651 = vpop.f32.mrb[0].mxu0
    %v652 = vadd.f32 0.0, %v651
    %v653 = vpop.f32.mrb[0].mxu0
    %v654 = vpop.f32.mrb[0].mxu0
    %v655 = vpop.f32.mrb[0].mxu0
    %656 = vdwg.mxu0
    %v657 = vmax.f32 %v652, 0.0
    %v658 = vpack.c.bf16 %v657, %v657
    %s659 = scalar_lea.vmem [#allocation6], 320
    %v660 = vld [vmem:[%s659] sm:$0xf]
    %v661 = vld [vmem:[%s659 + $0x4] sm:$0xf]
    %v662 = vld [vmem:[%s659 + $0x8] sm:$0xf]
    %v663 = vld [vmem:[%s659 + $0xc] sm:$0xf]
    %v664 = vld [vmem:[%s659 + $0x10] sm:$0xf]
    %v665 = vld [vmem:[%s659 + $0x14] sm:$0xf]
    %v666 = vld [vmem:[%s659 + $0x18] sm:$0xf]
    %v667 = vld [vmem:[%s659 + $0x1c] sm:$0xf]
    %v668 = vld [vmem:[%s659 + $0x20] sm:$0xf]
    %v669 = vld [vmem:[%s659 + $0x24] sm:$0xf]
    %v670 = vld [vmem:[%s659 + $0x28] sm:$0xf]
    %v671 = vld [vmem:[%s659 + $0x2c] sm:$0xf]
    %v672 = vld [vmem:[%s659 + $0x30] sm:$0xf]
    %v673 = vld [vmem:[%s659 + $0x34] sm:$0xf]
    %v674 = vld [vmem:[%s659 + $0x38] sm:$0xf]
    %v675 = vld [vmem:[%s659 + $0x3c] sm:$0xf]
    %v692 = vunpack.c.l.b16 %v660
    %v693 = vunpack.c.l.b16 %v661
    %v694 = vunpack.c.l.b16 %v662
    %v695 = vunpack.c.l.b16 %v663
    %v696 = vunpack.c.l.b16 %v664
    %v697 = vunpack.c.l.b16 %v665
    %v698 = vunpack.c.l.b16 %v666
    %v699 = vunpack.c.l.b16 %v667
    %v700 = vunpack.c.l.b16 %v668
    %v701 = vunpack.c.l.b16 %v669
    %v702 = vunpack.c.l.b16 %v670
    %v703 = vunpack.c.l.b16 %v671
    %v704 = vunpack.c.l.b16 %v672
    %v705 = vunpack.c.l.b16 %v673
    %v706 = vunpack.c.l.b16 %v674
    %v707 = vunpack.c.l.b16 %v675
    %v708 = vpack.c.b16 %v693, %v692
    %v709 = vpack.c.b16 %v695, %v694
    %v710 = vpack.c.b16 %v697, %v696
    %v711 = vpack.c.b16 %v699, %v698
    %v712 = vpack.c.b16 %v701, %v700
    %v713 = vpack.c.b16 %v703, %v702
    %v714 = vpack.c.b16 %v705, %v704
    %v715 = vpack.c.b16 %v707, %v706
    %724 = vmatprep.subr.bf16.mxu0 0
    %725 = vmatpush1.bf16.msra.mxu0 %v708
    %726 = vmatprep.subr.bf16.mxu0 0
    %727 = vmatpush1.bf16.msra.mxu0 %v709
    %728 = vmatprep.subr.bf16.mxu0 0
    %729 = vmatpush1.bf16.msra.mxu0 %v710
    %730 = vmatprep.subr.bf16.mxu0 0
    %731 = vmatpush1.bf16.msra.mxu0 %v711
    %732 = vmatprep.subr.bf16.mxu0 0
    %733 = vmatpush1.bf16.msra.mxu0 %v712
    %734 = vmatprep.subr.bf16.mxu0 0
    %735 = vmatpush1.bf16.msra.mxu0 %v713
    %736 = vmatprep.subr.bf16.mxu0 0
    %737 = vmatpush1.bf16.msra.mxu0 %v714
    %738 = vmatprep.subr.bf16.mxu0 0
    %739 = vmatpush1.bf16.msra.mxu0 %v715
    %740 = vmatprep.subr.bf16.mxu0 0
    %741 = vmatpush1.bf16.msra.mxu0 0
    %742 = vmatprep.subr.bf16.mxu0 0
    %743 = vmatpush1.bf16.msra.mxu0 0
    %744 = vmatprep.subr.bf16.mxu0 0
    %745 = vmatpush1.bf16.msra.mxu0 0
    %746 = vmatprep.subr.bf16.mxu0 0
    %747 = vmatpush1.bf16.msra.mxu0 0
    %748 = vmatprep.subr.bf16.mxu0 0
    %749 = vmatpush1.bf16.msra.mxu0 0
    %750 = vmatprep.subr.bf16.mxu0 0
    %751 = vmatpush1.bf16.msra.mxu0 0
    %752 = vmatprep.subr.bf16.mxu0 0
    %753 = vmatpush1.bf16.msra.mxu0 0
    %754 = vmatprep.subr.bf16.mxu0 0
    %755 = vmatpush1.bf16.msra.mxu0 0
    %756 = vmatprep.mubr.bf16.mxu0 0
    %757 = vmatmul.mubr.bf16.gmra.mrb[0].mxu0 %v658
    %v758 = vpop.f32.mrb[0].mxu0
    %v759 = vadd.f32 0.0, %v758
    %v760 = vpop.f32.mrb[0].mxu0
    %v761 = vpop.f32.mrb[0].mxu0
    %v762 = vpop.f32.mrb[0].mxu0
    %763 = vdwg.mxu0
    %v764 = vmax.f32 %v759, 0.0
    %v765 = vpack.c.bf16 %v764, %v764
    %s766 = scalar_lea.vmem [#allocation6], 384
    %v767 = vld [vmem:[%s766] sm:$0xf]
    %v768 = vld [vmem:[%s766 + $0x4] sm:$0xf]
    %v769 = vld [vmem:[%s766 + $0x8] sm:$0xf]
    %v770 = vld [vmem:[%s766 + $0xc] sm:$0xf]
    %v771 = vld [vmem:[%s766 + $0x10] sm:$0xf]
    %v772 = vld [vmem:[%s766 + $0x14] sm:$0xf]
    %v773 = vld [vmem:[%s766 + $0x18] sm:$0xf]
    %v774 = vld [vmem:[%s766 + $0x1c] sm:$0xf]
    %v775 = vld [vmem:[%s766 + $0x20] sm:$0xf]
    %v776 = vld [vmem:[%s766 + $0x24] sm:$0xf]
    %v777 = vld [vmem:[%s766 + $0x28] sm:$0xf]
    %v778 = vld [vmem:[%s766 + $0x2c] sm:$0xf]
    %v779 = vld [vmem:[%s766 + $0x30] sm:$0xf]
    %v780 = vld [vmem:[%s766 + $0x34] sm:$0xf]
    %v781 = vld [vmem:[%s766 + $0x38] sm:$0xf]
    %v782 = vld [vmem:[%s766 + $0x3c] sm:$0xf]
    %v799 = vunpack.c.l.b16 %v767
    %v800 = vunpack.c.l.b16 %v768
    %v801 = vunpack.c.l.b16 %v769
    %v802 = vunpack.c.l.b16 %v770
    %v803 = vunpack.c.l.b16 %v771
    %v804 = vunpack.c.l.b16 %v772
    %v805 = vunpack.c.l.b16 %v773
    %v806 = vunpack.c.l.b16 %v774
    %v807 = vunpack.c.l.b16 %v775
    %v808 = vunpack.c.l.b16 %v776
    %v809 = vunpack.c.l.b16 %v777
    %v810 = vunpack.c.l.b16 %v778
    %v811 = vunpack.c.l.b16 %v779
    %v812 = vunpack.c.l.b16 %v780
    %v813 = vunpack.c.l.b16 %v781
    %v814 = vunpack.c.l.b16 %v782
    %v815 = vpack.c.b16 %v800, %v799
    %v816 = vpack.c.b16 %v802, %v801
    %v817 = vpack.c.b16 %v804, %v803
    %v818 = vpack.c.b16 %v806, %v805
    %v819 = vpack.c.b16 %v808, %v807
    %v820 = vpack.c.b16 %v810, %v809
    %v821 = vpack.c.b16 %v812, %v811
    %v822 = vpack.c.b16 %v814, %v813
    %831 = vmatprep.subr.bf16.mxu0 0
    %832 = vmatpush1.bf16.msra.mxu0 %v815
    %833 = vmatprep.subr.bf16.mxu0 0
    %834 = vmatpush1.bf16.msra.mxu0 %v816
    %835 = vmatprep.subr.bf16.mxu0 0
    %836 = vmatpush1.bf16.msra.mxu0 %v817
    %837 = vmatprep.subr.bf16.mxu0 0
    %838 = vmatpush1.bf16.msra.mxu0 %v818
    %839 = vmatprep.subr.bf16.mxu0 0
    %840 = vmatpush1.bf16.msra.mxu0 %v819
    %841 = vmatprep.subr.bf16.mxu0 0
    %842 = vmatpush1.bf16.msra.mxu0 %v820
    %843 = vmatprep.subr.bf16.mxu0 0
    %844 = vmatpush1.bf16.msra.mxu0 %v821
    %845 = vmatprep.subr.bf16.mxu0 0
    %846 = vmatpush1.bf16.msra.mxu0 %v822
    %847 = vmatprep.subr.bf16.mxu0 0
    %848 = vmatpush1.bf16.msra.mxu0 0
    %849 = vmatprep.subr.bf16.mxu0 0
    %850 = vmatpush1.bf16.msra.mxu0 0
    %851 = vmatprep.subr.bf16.mxu0 0
    %852 = vmatpush1.bf16.msra.mxu0 0
    %853 = vmatprep.subr.bf16.mxu0 0
    %854 = vmatpush1.bf16.msra.mxu0 0
    %855 = vmatprep.subr.bf16.mxu0 0
    %856 = vmatpush1.bf16.msra.mxu0 0
    %857 = vmatprep.subr.bf16.mxu0 0
    %858 = vmatpush1.bf16.msra.mxu0 0
    %859 = vmatprep.subr.bf16.mxu0 0
    %860 = vmatpush1.bf16.msra.mxu0 0
    %861 = vmatprep.subr.bf16.mxu0 0
    %862 = vmatpush1.bf16.msra.mxu0 0
    %863 = vmatprep.mubr.bf16.mxu0 0
    %864 = vmatmul.mubr.bf16.gmra.mrb[0].mxu0 %v765
    %v865 = vpop.f32.mrb[0].mxu0
    %v866 = vadd.f32 0.0, %v865
    %v867 = vpop.f32.mrb[0].mxu0
    %v868 = vpop.f32.mrb[0].mxu0
    %v869 = vpop.f32.mrb[0].mxu0
    %870 = vdwg.mxu0
    %v871 = vmax.f32 %v866, 0.0
    %872 = vst.msk [vmem:[%s5] sm:$0xff] %vm442, %v871
    // Predicated region
    $region30: #{autoencoder_forward.1} parent=1 // pred_check
      _
    $region31: #{autoencoder_forward.1} parent=1 // pred_check_branch
      %874 = sbr.rel (0) target = $region33
    $region32: #{autoencoder_forward.1} parent=1 // pred_region
      _
    $region33: #{autoencoder_forward.1} parent=1 // pred_fallthru
      _
    // Predicated region
    $region34: #{autoencoder_forward.1} parent=1 // pred_check
      _
    $region35: #{autoencoder_forward.1} parent=1 // pred_check_branch
      %876 = sbr.rel (0) target = $region37
    $region36: #{autoencoder_forward.1} parent=1 // pred_region
      _
    $region37: #{autoencoder_forward.1} parent=1 // pred_fallthru
      _
    // Predicated region
    $region38: #{autoencoder_forward.1} parent=1 // pred_check
      _
    $region39: #{autoencoder_forward.1} parent=1 // pred_check_branch
      %878 = sbr.rel (0) target = $region41
    $region40: #{autoencoder_forward.1} parent=1 // pred_region
      _
    $region41: #{autoencoder_forward.1} parent=1 // pred_fallthru
      _
    // Predicated region
    $region42: #{autoencoder_forward.1} parent=1 // pred_check
      _
    $region43: #{autoencoder_forward.1} parent=1 // pred_check_branch
      %880 = sbr.rel (0) target = $region45
    $region44: #{autoencoder_forward.1} parent=1 // pred_region
      _
    $region45: #{autoencoder_forward.1} parent=1 // pred_fallthru
      _
    %881 = vsyncpa [#allocation3], 1
    %882 = vsyncpa [#allocation5], 1

</llo_original>
